<compile_context>
chip_gen: v7x
topology: tpu7x:2x2x1
jax: 0.10.0
libtpu: 0.0.40
codegen_flags: <defaults>
</compile_context>

<pallas_src>
import jax
import jax.numpy as jnp
from jax.experimental import pallas as pl
from jax.experimental.pallas import tpu as pltpu


# ---------------------------------------------------------------- kernel ----
def self_attn1d_kernel(gamma_ref, x_ref, wv_ref, bv_ref, out_ref):
    # x tile:  (tile_b, C)   resident across the inner (output-channel) axis
    # Wv tile: (C, tile_n)   bv tile: (1, tile_n)   out tile: (tile_b, tile_n)
    tile_n = out_ref.shape[-1]
    j = pl.program_id(1)
    off = pl.multiple_of(j * tile_n, tile_n)

    x = x_ref[...]

    # softmax over a size-1 axis == 1.0 -> only the value projection matters.
    # MXU matmul in the weight dtype (bf16 fast path), f32 accumulation.
    v = jnp.dot(x.astype(wv_ref.dtype), wv_ref[...],
                preferred_element_type=jnp.float32)           # (tile_b, tile_n)
    v = v + bv_ref[...].astype(jnp.float32)

    # residual slice of x for this output-channel tile (tile_n divides C, so
    # this dynamic lane slice is always in-bounds and 128-aligned)
    x_res = x_ref[:, pl.ds(off, tile_n)].astype(jnp.float32)

    gamma = gamma_ref[0]                                      # scalar in SMEM
    out_ref[...] = (gamma * v + x_res).astype(out_ref.dtype)


# --------------------------------------------------------------- helpers ----
def _round_up(a, m):
    return ((a + m - 1) // m) * m


def _pick_tile_n(C, target):
    """Largest multiple of 128 that divides C and does not exceed target."""
    if C % 128 != 0:
        return C
    units = C // 128
    t = max(1, min(units, max(1, target // 128)))
    while units % t != 0:
        t -= 1
    return t * 128


def _spec(shape, index_map, buffers=None):
    """BlockSpec with optional explicit buffer count (graceful fallback)."""
    if buffers is None:
        return pl.BlockSpec(shape, index_map)
    try:
        return pl.BlockSpec(shape, index_map, pipeline_mode=pl.Buffered(buffers))
    except (TypeError, AttributeError):
        return pl.BlockSpec(shape, index_map)


def _vmem_capacity_bytes():
    try:
        return int(pltpu.get_tpu_info().vmem_capacity_bytes)
    except Exception:
        return 64 * 1024 * 1024          # conservative (v7x per-TC VMEM)


# --------------------------------------------------------------- wrapper ----
def self_attn1d(x, wq_t, bq, wk_t, bk, wv_t, bv, gamma, *,
                tile_b=None, tile_n=None, matmul_dtype=jnp.bfloat16,
                out_dtype=None, donate_x=False, return_attn=False):
    """Pallas implementation of SelfAttn1D.forward.

    x:     (B, C) activations.
    wq_t:  (C, C//k)  query_conv.weight^T   (unused: softmax over size-1 == 1)
    wk_t:  (C, C//k)  key_conv.weight^T     (unused: softmax over size-1 == 1)
    wv_t:  (C, C)     value_conv.weight^T
    bq/bk/bv: conv biases; gamma: (1,) learned scale.

    matmul_dtype: dtype the GEMM runs in on the MXU (bf16 default, f32 exact).
    out_dtype:    output dtype (default x.dtype; pass bf16 to halve HBM writes).
    donate_x:     alias x's HBM buffer to the output (only if dtypes match).
    """
    del wq_t, bq, wk_t, bk      # softmax over a size-1 axis is identically 1.0

    B, C = x.shape
    out_dtype = x.dtype if out_dtype is None else jnp.dtype(out_dtype)

    w_itemsize = jnp.dtype(matmul_dtype).itemsize
    x_itemsize = x.dtype.itemsize
    o_itemsize = jnp.dtype(out_dtype).itemsize

    vmem_cap = _vmem_capacity_bytes()
    vmem_budget = (vmem_cap * 3) // 4           # headroom for Mosaic scratch

    # ---- output-channel (N) tile: multiple of 128 that divides C ------------
    if tile_n is None:
        tile_n = C
    tile_n = _pick_tile_n(C, min(tile_n, C))

    # ---- batch tile: >=2 grid steps when possible, 8-aligned, <=512 ---------
    if tile_b is None:
        max_tile_b = 512
        if B <= 8:
            tile_b = B
        else:
            num_b = max(2, -(-B // max_tile_b))       # at least 2 batch steps
            tile_b = _round_up(-(-B // num_b), 8)
    tile_b = min(tile_b, B)
    if tile_b < B:
        tile_b = min(_round_up(tile_b, 8), B)

    # ---- VMEM accounting: double-buffered x/out tiles + weight buffers ------
    def _vmem_needed(tb, tn):
        nbuf_w = 1 if tn == C else 2                  # constant index -> 1 buf
        w_bytes = nbuf_w * (C * tn * w_itemsize + _round_up(tn, 128) * 4)
        x_bytes = 2 * tb * C * x_itemsize
        o_bytes = 2 * tb * tn * o_itemsize
        return w_bytes + x_bytes + o_bytes + (2 << 20)

    # shrink the weight (N) tile first, then the batch tile, to fit the budget
    while _vmem_needed(tile_b, tile_n) > vmem_budget:
        if C % 128 == 0 and tile_n > 128:
            tile_n = _pick_tile_n(C, tile_n // 2)
        elif tile_b > 8:
            tile_b = max(8, _round_up(tile_b // 2, 8))
        else:
            break

    num_b = pl.cdiv(B, tile_b)
    num_n = pl.cdiv(C, tile_n)
    grid = (num_b, num_n)

    wv_m = wv_t.astype(matmul_dtype)
    bv2 = bv.reshape(1, C).astype(jnp.float32)
    gamma1 = jnp.asarray(gamma, dtype=jnp.float32).reshape(1)

    w_single = 1 if num_n == 1 else None              # single-buffer resident W
    in_specs = [
        pl.BlockSpec(memory_space=pltpu.MemorySpace.SMEM),          # gamma
        _spec((tile_b, C), lambda i, j: (i, 0)),                    # x
        _spec((C, tile_n), lambda i, j: (0, j), buffers=w_single),  # Wv^T
        _spec((1, tile_n), lambda i, j: (0, j), buffers=w_single),  # bv
    ]
    out_specs = pl.BlockSpec((tile_b, tile_n), lambda i, j: (i, j))

    vmem_limit = int(min(max(_vmem_needed(tile_b, tile_n) + (4 << 20), 32 << 20),
                         vmem_cap - (8 << 20)))

    x_bytes = B * C * x_itemsize
    out_bytes = B * C * o_itemsize
    w_bytes = C * C * w_itemsize + C * 4

    call_kwargs = dict(
        out_shape=jax.ShapeDtypeStruct((B, C), out_dtype),
        grid=grid,
        in_specs=in_specs,
        out_specs=out_specs,
        compiler_params=pltpu.CompilerParams(
            dimension_semantics=("parallel", "parallel"),
            vmem_limit_bytes=vmem_limit,
        ),
        cost_estimate=pl.CostEstimate(
            flops=2 * B * C * C + 3 * B * C,
            transcendentals=0,
            bytes_accessed=x_bytes + out_bytes + w_bytes,
        ),
    )
    if donate_x and out_dtype == x.dtype:
        call_kwargs["input_output_aliases"] = {1: 0}

    out = pl.pallas_call(self_attn1d_kernel, **call_kwargs)(gamma1, x, wv_m, bv2)

    if return_attn:
        # attention = softmax over a size-1 axis -> all ones, (B, 1, 1).
        return out, jnp.ones((B, 1, 1), dtype=jnp.float32)
    return out


# ------------------------------------------------------------- reference ----
def _reference(x, wq_t, bq, wk_t, bk, wv_t, bv, gamma):
    """Faithful JAX transcription of the PyTorch forward (T = 1)."""
    q = x @ wq_t + bq                                       # (B, Cq)
    k = x @ wk_t + bk                                       # (B, Cq)
    energy = jnp.sum(q * k, axis=-1)[:, None, None]         # (B, 1, 1)
    attn = jax.nn.softmax(energy, axis=-1)                  # (B, 1, 1) == 1.0
    v = x @ wv_t + bv                                       # (B, C)
    return gamma * (v * attn[:, :, 0]) + x


# ------------------------------------------------------------------ demo ----
if __name__ == "__main__":
    def _make_inputs(key, B, C, kdiv):
        Cq = C // kdiv
        kx, kq, kk_, kv, kbq, kbk, kbv = jax.random.split(key, 7)
        x = jax.random.normal(kx, (B, C), dtype=jnp.float32)
        wq_t = 0.1 * jax.random.normal(kq, (C, Cq), dtype=jnp.float32)
        wk_t = 0.1 * jax.random.normal(kk_, (C, Cq), dtype=jnp.float32)
        wv_t = 0.1 * jax.random.normal(kv, (C, C), dtype=jnp.float32)
        bq = 0.1 * jax.random.normal(kbq, (Cq,), dtype=jnp.float32)
        bk = 0.1 * jax.random.normal(kbk, (Cq,), dtype=jnp.float32)
        bv = 0.1 * jax.random.normal(kbv, (C,), dtype=jnp.float32)
        return x, wq_t, bq, wk_t, bk, wv_t, bv

    key = jax.random.PRNGKey(0)
    # PyTorch inits gamma = 0 (out == x); use a nonzero value so the matmul
    # path is actually exercised and checked.
    gamma = jnp.array([0.5], dtype=jnp.float32)

    # --- config 1: single N tile, two batch grid steps (B=16, C=128) --------
    B, C, kdiv = 16, 128, 8
    k1, k2 = jax.random.split(key)
    x, wq_t, bq, wk_t, bk, wv_t, bv = _make_inputs(k1, B, C, kdiv)
    ref = _reference(x, wq_t, bq, wk_t, bk, wv_t, bv, gamma[0])

    out_bf16 = self_attn1d(x, wq_t, bq, wk_t, bk, wv_t, bv, gamma)
    out_bf16 = jax.block_until_ready(out_bf16)
    assert out_bf16.shape == (B, C)
    assert jnp.allclose(out_bf16, ref, atol=2e-2, rtol=2e-2), "bf16 path mismatch"

    out_f32, attn = self_attn1d(x, wq_t, bq, wk_t, bk, wv_t, bv, gamma,
                                matmul_dtype=jnp.float32, return_attn=True)
    out_f32 = jax.block_until_ready(out_f32)
    assert jnp.allclose(out_f32, ref, atol=1e-5, rtol=1e-5), "f32 path mismatch"
    assert attn.shape == (B, 1, 1) and bool(jnp.all(attn == 1.0))

    # --- config 2: exercise the output-channel (N) tiling path --------------
    B2, C2 = 32, 256
    x2, wq2, bq2, wk2, bk2, wv2, bv2 = _make_inputs(k2, B2, C2, kdiv)
    ref2 = _reference(x2, wq2, bq2, wk2, bk2, wv2, bv2, gamma[0])

    out2 = self_attn1d(x2, wq2, bq2, wk2, bk2, wv2, bv2, gamma,
                       tile_b=16, tile_n=128, matmul_dtype=jnp.float32)
    out2 = jax.block_until_ready(out2)
    assert out2.shape == (B2, C2)
    assert jnp.allclose(out2, ref2, atol=1e-5, rtol=1e-5), "N-tiled path mismatch"

    print("KERNEL_OK")
</pallas_src>

<mosaic_0001>
module attributes {stable_mosaic.version = 11 : i64} {
  func.func @self_attn1d_kernel(%arg0: i32, %arg1: i32, %arg2: memref<1xf32, #tpu.memory_space<smem>>, %arg3: memref<8x128xf32, #tpu.memory_space<vmem>>, %arg4: memref<128x128xbf16, #tpu.memory_space<vmem>>, %arg5: memref<1x128xf32, #tpu.memory_space<vmem>>, %arg6: memref<8x128xf32, #tpu.memory_space<vmem>>) attributes {dimension_semantics = [#tpu.dimension_semantics<parallel>, #tpu.dimension_semantics<parallel>], iteration_bounds = array<i64: 2, 1>, scalar_prefetch = 0 : i64, scratch_operands = 0 : i64, tpu.core_type = #tpu.core_type<tc>, window_params = [{transform_indices = @transform_0, window_bounds = array<i64: 1>}, {transform_indices = @transform_1, window_bounds = array<i64: 8, 128>}, {pipeline_mode = #tpu.pipeline_mode<synchronous>, transform_indices = @transform_2, window_bounds = array<i64: 128, 128>}, {pipeline_mode = #tpu.pipeline_mode<synchronous>, transform_indices = @transform_3, window_bounds = array<i64: 1, 128>}, {transform_indices = @transform_4, window_bounds = array<i64: 8, 128>}]} {
    %c128_i32 = arith.constant 128 : i32
    %0 = arith.muli %arg1, %c128_i32 : i32
    %1 = tpu.assume_multiple %0, 128 : i32
    %c0 = arith.constant 0 : index
    %c0_0 = arith.constant 0 : index
    %2 = vector.load %arg3[%c0, %c0_0] : memref<8x128xf32, #tpu.memory_space<vmem>>, vector<8x128xf32>
    %3 = arith.truncf %2 : vector<8x128xf32> to vector<8x128xbf16>
    %c0_1 = arith.constant 0 : index
    %c0_2 = arith.constant 0 : index
    %4 = vector.load %arg4[%c0_1, %c0_2] : memref<128x128xbf16, #tpu.memory_space<vmem>>, vector<128x128xbf16>
    %cst = arith.constant dense<0.000000e+00> : vector<8x128xf32>
    %5 = tpu.matmul %3, %4, %cst {dimension_numbers = #tpu.dot_dimension_numbers<[1], [0], [0], [1], [0, 0, 1, 1], [], []>} : vector<8x128xbf16>, vector<128x128xbf16>, vector<8x128xf32> -> vector<8x128xf32>
    %c0_3 = arith.constant 0 : index
    %c0_4 = arith.constant 0 : index
    %6 = vector.load %arg5[%c0_3, %c0_4] : memref<1x128xf32, #tpu.memory_space<vmem>>, vector<1x128xf32>
    %7 = vector.broadcast %6 : vector<1x128xf32> to vector<8x128xf32>
    %8 = arith.addf %5, %7 : vector<8x128xf32>
    %c0_5 = arith.constant 0 : index
    %9 = arith.index_cast %1 : i32 to index
    %10 = vector.load %arg3[%c0_5, %9] : memref<8x128xf32, #tpu.memory_space<vmem>>, vector<8x128xf32>
    %c0_6 = arith.constant 0 : index
    %11 = memref.load %arg2[%c0_6] : memref<1xf32, #tpu.memory_space<smem>>
    %12 = vector.broadcast %11 : f32 to vector<8x128xf32>
    %13 = arith.mulf %12, %8 : vector<8x128xf32>
    %14 = arith.addf %13, %10 : vector<8x128xf32>
    %c0_7 = arith.constant 0 : index
    %c0_8 = arith.constant 0 : index
    %15 = vector.load %arg6[%c0_7, %c0_8] : memref<8x128xf32, #tpu.memory_space<vmem>>, vector<8x128xf32>
    tpu.vector_store %arg6[%c0_7, %c0_8], %14 {strides = array<i32>} : memref<8x128xf32, #tpu.memory_space<vmem>>, vector<8x128xf32>,
    return
  }
  func.func @transform_0(%arg0: i32, %arg1: i32) -> i32 {
    %c0_i32 = arith.constant 0 : i32
    %c0_i32_0 = arith.constant 0 : i32
    return %c0_i32 : i32
  }
  func.func @transform_1(%arg0: i32, %arg1: i32) -> (i32, i32) {
    %c0_i32 = arith.constant 0 : i32
    %c0_i32_0 = arith.constant 0 : i32
    return %arg0, %c0_i32 : i32, i32
  }
  func.func @transform_2(%arg0: i32, %arg1: i32) -> (i32, i32) {
    %c0_i32 = arith.constant 0 : i32
    %c0_i32_0 = arith.constant 0 : i32
    return %c0_i32, %arg1 : i32, i32
  }
  func.func @transform_3(%arg0: i32, %arg1: i32) -> (i32, i32) {
    %c0_i32 = arith.constant 0 : i32
    %c0_i32_0 = arith.constant 0 : i32
    return %c0_i32, %arg1 : i32, i32
  }
  func.func @transform_4(%arg0: i32, %arg1: i32) -> (i32, i32) {
    %c0_i32 = arith.constant 0 : i32
    return %arg0, %arg1 : i32, i32
  }
}

</mosaic_0001>

<llo_original>
// kernel: tpu_custom_call.1
$region0: #{tpu_custom_call.1}
  #allocation0 [shape = 'u32[]', space=smem, size = 0x4, offset = 0x4, fixed_abs, tag = 'smem constant byte address 0x4 - core index']
  #allocation1 [shape = 'u32[144,128]{1,0:T(1,128)}', space=vmem, size = 0x12000, scoped, tag = 'internal scratch']
  #allocation2 [shape = 'f32[1]{0:T(128)S(6)}', space=smem, size = 0x200, scoped, tag = 'scoped memory for tpu_custom_call.1']
  %s0 = inlined_call_operand.<no memory space> [shape: f32[1], index: 0, kind: input, shape index: {}]
  %s1 = inlined_call_operand.hbm [shape: f32[16,128], index: 1, kind: input, shape index: {}]
  %s2 = inlined_call_operand.hbm [shape: bf16[128,128], index: 2, kind: input, shape index: {}]
  %s3 = inlined_call_operand.vmem [shape: f32[1,128], index: 3, kind: input, shape index: {}]
  %s4 = inlined_call_operand.hbm [shape: f32[16,128], index: 4, kind: output, shape index: {}]
  %s5 = sld [smem:[#allocation0]]
  $region57: #{tpu_custom_call.1} parent=0
    _
  %s7 = ssub.s32 1, %s5
  %s8 = scalar_select 0, %s7, %s5
  %9 = sst [smem:[#allocation2]] %s0
  $region1: #{tpu_custom_call.1} parent=0
    #allocation3 [shape = 'u8[8192]{0}', space=vmem, size = 0x2000, scoped, tag = 'input window, operand 1']
    #allocation4 [shape = 's32[2]{0}', space=sflag, size = 0x8, scoped, tag = 'scoped memory for tpu_custom_call.1']
    #allocation5 [shape = 's32[2]{0}', space=sflag, size = 0x8, scoped, tag = 'scoped memory for tpu_custom_call.1']
    #allocation6 [shape = 'u8[32768]{0}', space=vmem, size = 0x8000, scoped, tag = 'input window, operand 2, single buffered']
    #allocation7 [shape = 's32[1]{0}', space=sflag, size = 0x4, scoped, tag = 'scoped memory for tpu_custom_call.1']
    #allocation8 [shape = 'u8[8192]{0}', space=vmem, size = 0x2000, scoped, tag = 'output window, operand 0']
    %10 = vsyncpa [#allocation4], 0
    %s11 = scalar_lea.sflag [#allocation4], 1
    %12 = vsyncpa %s11, 0
    %13 = vsyncpa [#allocation7], 0
    %14 = vsyncpa [#allocation5], 0
    %s15 = scalar_lea.sflag [#allocation5], 1
    %16 = vsyncpa %s15, 0
    loop: start=0, step=1, limit=4
    $region2: #{tpu_custom_call.1} parent=1 // loop_pre_header
      _
    $region3: #{tpu_custom_call.1} parent=1 // loop_header
      %s18 = sphi 0, %s22
      %p19 = scmp.ge.s32.totalorder %s18, 4
      %s25 = sphi 0, %s37
      %s26 = sphi 0, %s33
      %s27 = sphi 0, %s25
      %s28 = sphi 0, %s26
      %s29 = sphi 0, %s27
      %s30 = sphi 0, %s28
      %s38 = sphi 0, %s38
      %s40 = sphi 0, %s38
      %s41 = sphi 0, %s40
      %s55 = sphi 0, %s41
      %s61 = sphi 0, %s63
      %s64 = sphi 0, %s61
      %s65 = sphi 0, %s64
      %s81 = sphi 0, %s65
      %s87 = sphi 0, %s89
      %s90 = sphi 0, %s87
      %s91 = sphi 0, %s90
      %s107 = sphi 0, %s91
      %s113 = sphi 0, %s115
      %s116 = sphi 0, %s113
      %s117 = sphi 0, %s116
      %s133 = sphi 0, %s117
      %s141 = sphi 0, %s143
      %s144 = sphi 0, %s141
      %s145 = sphi 0, %s144
      %s161 = sphi 0, %s145
    $region4: #{tpu_custom_call.1} parent=1 // loop_header_branch
      %21 = sbr.rel (%p19) target = $region8
    $region5: #{tpu_custom_call.1} parent=1 // loop_body
      %s23 = ssub.s32 %s18, 1
      %s24 = ssub.s32 %s18, 2
      %s31 = sadd.s32 1, %s26
      %p32 = scmp.ge.s32.totalorder %s31, 1
      %s33 = scalar_select %p32, 0, %s31
      %s34 = sadd.s32 1, %s25
      %s35 = scalar_select %p32, %s34, %s25
      %p36 = scmp.ge.s32.totalorder %s35, 2
      %s37 = scalar_select %p36, 0, %s35
      %s39 = sadd.s32 %s38, 1
      %p42 = scmp.eq.s32.totalorder %s18, 1
      %p43 = scmp.ne.s32.totalorder %s38, %s40
      %p44 = scmp.eq.s32.totalorder %s18, 0
      %p45 = por %p43, %p44
      %p46 = scmp.ne.s32.totalorder %s38, %s40
      %p47 = scmp.eq.s32.totalorder %s23, 1
      %p48 = por %p46, %p47
      %p49 = scmp.ne.s32.totalorder %s40, %s41
      %p50 = scmp.eq.s32.totalorder %s23, 0
      %p51 = por %p49, %p50
      %p52 = scmp.ne.s32.totalorder %s40, %s41
      %p53 = scmp.eq.s32.totalorder %s24, 1
      %p54 = por %p52, %p53
      %p56 = scmp.ne.s32.totalorder %s41, %s55
      %p57 = scmp.eq.s32.totalorder %s24, 0
      %p58 = por %p56, %p57
      %s59 = ssub.s32 %s25, %s37
      %p60 = scmp.eq.s32.totalorder %s59, 0
      %s62 = sadd.s32 %s61, 1
      %s63 = scalar_select %p60, %s61, %s62
      %p66 = pneg %p60
      %p67 = scmp.eq.s32.totalorder %s18, 1
      %p68 = por %p66, %p67
      %p69 = scmp.ne.s32.totalorder %s61, %s64
      %p70 = scmp.eq.s32.totalorder %s18, 0
      %p71 = por %p69, %p70
      %p72 = scmp.ne.s32.totalorder %s61, %s64
      %p73 = scmp.eq.s32.totalorder %s23, 1
      %p74 = por %p72, %p73
      %p75 = scmp.ne.s32.totalorder %s64, %s65
      %p76 = scmp.eq.s32.totalorder %s23, 0
      %p77 = por %p75, %p76
      %p78 = scmp.ne.s32.totalorder %s64, %s65
      %p79 = scmp.eq.s32.totalorder %s24, 1
      %p80 = por %p78, %p79
      %p82 = scmp.ne.s32.totalorder %s65, %s81
      %p83 = scmp.eq.s32.totalorder %s24, 0
      %p84 = por %p82, %p83
      %s85 = ssub.s32 %s26, %s33
      %p86 = scmp.eq.s32.totalorder %s85, 0
      %s88 = sadd.s32 %s87, 1
      %s89 = scalar_select %p86, %s87, %s88
      %p92 = pneg %p86
      %p93 = scmp.eq.s32.totalorder %s18, 1
      %p94 = por %p92, %p93
      %p95 = scmp.ne.s32.totalorder %s87, %s90
      %p96 = scmp.eq.s32.totalorder %s18, 0
      %p97 = por %p95, %p96
      %p98 = scmp.ne.s32.totalorder %s87, %s90
      %p99 = scmp.eq.s32.totalorder %s23, 1
      %p100 = por %p98, %p99
      %p101 = scmp.ne.s32.totalorder %s90, %s91
      %p102 = scmp.eq.s32.totalorder %s23, 0
      %p103 = por %p101, %p102
      %p104 = scmp.ne.s32.totalorder %s90, %s91
      %p105 = scmp.eq.s32.totalorder %s24, 1
      %p106 = por %p104, %p105
      %p108 = scmp.ne.s32.totalorder %s91, %s107
      %p109 = scmp.eq.s32.totalorder %s24, 0
      %p110 = por %p108, %p109
      %s111 = ssub.s32 %s26, %s33
      %p112 = scmp.eq.s32.totalorder %s111, 0
      %s114 = sadd.s32 %s113, 1
      %s115 = scalar_select %p112, %s113, %s114
      %p118 = pneg %p112
      %p119 = scmp.eq.s32.totalorder %s18, 1
      %p120 = por %p118, %p119
      %p121 = scmp.ne.s32.totalorder %s113, %s116
      %p122 = scmp.eq.s32.totalorder %s18, 0
      %p123 = por %p121, %p122
      %p124 = scmp.ne.s32.totalorder %s113, %s116
      %p125 = scmp.eq.s32.totalorder %s23, 1
      %p126 = por %p124, %p125
      %p127 = scmp.ne.s32.totalorder %s116, %s117
      %p128 = scmp.eq.s32.totalorder %s23, 0
      %p129 = por %p127, %p128
      %p130 = scmp.ne.s32.totalorder %s116, %s117
      %p131 = scmp.eq.s32.totalorder %s24, 1
      %p132 = por %p130, %p131
      %p134 = scmp.ne.s32.totalorder %s117, %s133
      %p135 = scmp.eq.s32.totalorder %s24, 0
      %p136 = por %p134, %p135
      %s137 = ssub.s32 %s25, %s37
      %s138 = ssub.s32 %s26, %s33
      %s139 = sor.u32 %s137, %s138
      %p140 = scmp.eq.s32.totalorder %s139, 0
      %s142 = sadd.s32 %s141, 1
      %s143 = scalar_select %p140, %s141, %s142
      %p146 = pneg %p140
      %p147 = scmp.eq.s32.totalorder %s18, 1
      %p148 = por %p146, %p147
      %p149 = scmp.ne.s32.totalorder %s141, %s144
      %p150 = scmp.eq.s32.totalorder %s18, 0
      %p151 = por %p149, %p150
      %p152 = scmp.ne.s32.totalorder %s141, %s144
      %p153 = scmp.eq.s32.totalorder %s23, 1
      %p154 = por %p152, %p153
      %p155 = scmp.ne.s32.totalorder %s144, %s145
      %p156 = scmp.eq.s32.totalorder %s23, 0
      %p157 = por %p155, %p156
      %p158 = scmp.ne.s32.totalorder %s144, %s145
      %p159 = scmp.eq.s32.totalorder %s24, 1
      %p160 = por %p158, %p159
      %p162 = scmp.ne.s32.totalorder %s145, %s161
      %p163 = scmp.eq.s32.totalorder %s24, 0
      %p164 = por %p162, %p163
      %p165 = scmp.le.s32.totalorder 1, %s18
      %p166 = scmp.lt.s32.totalorder %s18, 3
      %p167 = pnand %p165, %p166
      %p168 = pneg %p167
      // Predicated region
      $region9: #{tpu_custom_call.1} parent=5 // pred_check
        _
      $region10: #{tpu_custom_call.1} parent=5 // pred_check_branch
        %170 = sbr.rel (%p167) target = $region12
      $region11: #{tpu_custom_call.1} parent=5 // pred_region
        %s171 = ssub.s32 %s18, 1
        // Predicated region
        $region13: #{tpu_custom_call.1} parent=11 // pred_check
          %p172 = pneg %p51
        $region14: #{tpu_custom_call.1} parent=11 // pred_check_branch
          %174 = sbr.rel (%p172) target = $region16
        $region15: #{tpu_custom_call.1} parent=11 // pred_region
          _
        $region16: #{tpu_custom_call.1} parent=11 // pred_fallthru
          _
        // Predicated region
        $region17: #{tpu_custom_call.1} parent=11 // pred_check
          %p175 = pneg %p103
        $region18: #{tpu_custom_call.1} parent=11 // pred_check_branch
          %177 = sbr.rel (%p175) target = $region20
        $region19: #{tpu_custom_call.1} parent=11 // pred_region
          %s179 = ssub.s32 1024, 1024
          %180 = vsyncadd [#allocation7], %s179
          %s181 = smul.addr %s28, 64
          %s182 = scalar_lea.hbm %s2, %s181
          %s183 = sshll.u32 [#allocation6], 4
          %s184 = int_to_ptr.vmem [resolvable:$true] %s183
          %189 = dma.hbm_to_vmem [thread:$0]  %s182, 1024, %s184, [#allocation7], 64, 64, 4
        $region20: #{tpu_custom_call.1} parent=11 // pred_fallthru
          _
        // Predicated region
        $region21: #{tpu_custom_call.1} parent=11 // pred_check
          %p190 = pneg %p129
        $region22: #{tpu_custom_call.1} parent=11 // pred_check_branch
          %192 = sbr.rel (%p190) target = $region24
        $region23: #{tpu_custom_call.1} parent=11 // pred_region
          %p193 = scmp.lt.s32.totalorder %s28, 0
          %s194 = scalar_select %p193, %s28, 0
          %s195 = scalar_lea.vmem %s3, %s194
        $region24: #{tpu_custom_call.1} parent=11 // pred_fallthru
          _
      $region12: #{tpu_custom_call.1} parent=5 // pred_fallthru
        _
      %p196 = scmp.lt.s32.totalorder %s18, 2
      // Predicated region
      $region25: #{tpu_custom_call.1} parent=5 // pred_check
        %p197 = pneg %p196
      $region26: #{tpu_custom_call.1} parent=5 // pred_check_branch
        %199 = sbr.rel (%p197) target = $region28
      $region27: #{tpu_custom_call.1} parent=5 // pred_region
        // Predicated region
        $region29: #{tpu_custom_call.1} parent=27 // pred_check
          %p200 = pneg %p71
        $region30: #{tpu_custom_call.1} parent=27 // pred_check_branch
          %202 = sbr.rel (%p200) target = $region32
        $region31: #{tpu_custom_call.1} parent=27 // pred_region
          %s203 = sand.u32 %s61, 1
          %s204 = scalar_lea.sflag [#allocation4], %s203
          %s205 = sand.u32 %s61, 1
          %s206 = smul.addr %s205, 8
          %s207 = scalar_lea.vmem [#allocation3], %s206
          %s209 = ssub.s32 128, 128
          %210 = vsyncadd %s204, %s209
          %s211 = smul.addr %s25, 128
          %s212 = scalar_lea.hbm %s1, %s211
          %s214 = sshll.u32 %s207, 4
          %s215 = int_to_ptr.vmem [resolvable:$true] %s214
          %217 = dma.hbm_to_vmem [thread:$0]  %s212, 128, %s215, %s204
        $region32: #{tpu_custom_call.1} parent=27 // pred_fallthru
          _
      $region28: #{tpu_custom_call.1} parent=5 // pred_fallthru
        _
      %p218 = scmp.le.s32.totalorder 1, %s18
      %p219 = scmp.lt.s32.totalorder %s18, 3
      %p220 = pnand %p218, %p219
      %p221 = pneg %p220
      // Predicated region
      $region33: #{tpu_custom_call.1} parent=5 // pred_check
        _
      $region34: #{tpu_custom_call.1} parent=5 // pred_check_branch
        %223 = sbr.rel (%p220) target = $region36
      $region35: #{tpu_custom_call.1} parent=5 // pred_region
        %s224 = ssub.s32 %s18, 1
        %s225 = sand.u32 %s64, 1
        %s226 = scalar_lea.sflag [#allocation4], %s225
        %s227 = sand.u32 %s64, 1
        %s228 = smul.addr %s227, 8
        %s229 = scalar_lea.vmem [#allocation3], %s228
        // Predicated region
        $region37: #{tpu_custom_call.1} parent=35 // pred_check
          %p230 = pneg %p77
        $region38: #{tpu_custom_call.1} parent=35 // pred_check_branch
          %232 = sbr.rel (%p230) target = $region40
        $region39: #{tpu_custom_call.1} parent=35 // pred_region
          %233 = dma.done %s226, 128
        $region40: #{tpu_custom_call.1} parent=35 // pred_fallthru
          _
        // Predicated region
        $region41: #{tpu_custom_call.1} parent=35 // pred_check
          %p234 = pneg %p103
        $region42: #{tpu_custom_call.1} parent=35 // pred_check_branch
          %236 = sbr.rel (%p234) target = $region44
        $region43: #{tpu_custom_call.1} parent=35 // pred_region
          %237 = dma.done [#allocation7], 1024
        $region44: #{tpu_custom_call.1} parent=35 // pred_fallthru
          _
        %p238 = pneg %p51
        %p239 = pneg %p48
        %s240 = sand.u32 %s64, 1
        %s241 = scalar_lea.sflag [#allocation4], %s240
        %s242 = sand.u32 %s64, 1
        %s243 = smul.addr %s242, 8
        %s244 = scalar_lea.vmem [#allocation3], %s243
        %p245 = pneg %p77
        %p246 = pneg %p74
        %p247 = pneg %p103
        %p248 = pneg %p100
        %p249 = scmp.lt.s32.totalorder %s28, 0
        %s250 = scalar_select %p249, %s28, 0
        %s251 = scalar_lea.vmem %s3, %s250
        %p252 = pneg %p129
        %p253 = pneg %p126
        %p254 = pneg %p157
        %p255 = pneg %p154
        %s256 = sand.u32 %s144, 1
        %s257 = scalar_lea.sflag [#allocation5], %s256
        %s258 = sand.u32 %s144, 1
        %s259 = smul.addr %s258, 8
        %s260 = scalar_lea.vmem [#allocation8], %s259
        %p261 = scmp.lt.s32.totalorder %s28, 0
        %s262 = scalar_select %p261, %s28, 0
        %s263 = scalar_lea.vmem %s3, %s262
        %s265 = smul.u32 %s28, 128
        %v266 = vld [vmem:[%s229] sm:$0xff]
        %v267 = vpack.c.bf16 %v266, %v266
        %v268 = vld [vmem:[#allocation6] sm:$0xf]
        %v269 = vld [vmem:[#allocation6 + $0x4] sm:$0xf]
        %v270 = vld [vmem:[#allocation6 + $0x8] sm:$0xf]
        %v271 = vld [vmem:[#allocation6 + $0xc] sm:$0xf]
        %v272 = vld [vmem:[#allocation6 + $0x10] sm:$0xf]
        %v273 = vld [vmem:[#allocation6 + $0x14] sm:$0xf]
        %v274 = vld [vmem:[#allocation6 + $0x18] sm:$0xf]
        %v275 = vld [vmem:[#allocation6 + $0x1c] sm:$0xf]
        %v276 = vld [vmem:[#allocation6 + $0x20] sm:$0xf]
        %v277 = vld [vmem:[#allocation6 + $0x24] sm:$0xf]
        %v278 = vld [vmem:[#allocation6 + $0x28] sm:$0xf]
        %v279 = vld [vmem:[#allocation6 + $0x2c] sm:$0xf]
        %v280 = vld [vmem:[#allocation6 + $0x30] sm:$0xf]
        %v281 = vld [vmem:[#allocation6 + $0x34] sm:$0xf]
        %v282 = vld [vmem:[#allocation6 + $0x38] sm:$0xf]
        %v283 = vld [vmem:[#allocation6 + $0x3c] sm:$0xf]
        %v284 = vld [vmem:[%s263] sm:$0x1]
        %v286 = vlaneseq
        %v287 = vshrl.u32 %v286, 7
        %v288 = vsub.s32 0, %v287
        %v289 = vrot.slane %v284, %v288
        %v307 = vunpack.c.l.b16 %v268
        %v308 = vunpack.c.l.b16 %v269
        %v309 = vunpack.c.l.b16 %v270
        %v310 = vunpack.c.l.b16 %v271
        %v311 = vunpack.c.l.b16 %v272
        %v312 = vunpack.c.l.b16 %v273
        %v313 = vunpack.c.l.b16 %v274
        %v314 = vunpack.c.l.b16 %v275
        %v315 = vunpack.c.l.b16 %v276
        %v316 = vunpack.c.l.b16 %v277
        %v317 = vunpack.c.l.b16 %v278
        %v318 = vunpack.c.l.b16 %v279
        %v319 = vunpack.c.l.b16 %v280
        %v320 = vunpack.c.l.b16 %v281
        %v321 = vunpack.c.l.b16 %v282
        %v322 = vunpack.c.l.b16 %v283
        %v323 = vpack.c.b16 %v308, %v307
        %v324 = vpack.c.b16 %v310, %v309
        %v325 = vpack.c.b16 %v312, %v311
        %v326 = vpack.c.b16 %v314, %v313
        %v327 = vpack.c.b16 %v316, %v315
        %v328 = vpack.c.b16 %v318, %v317
        %v329 = vpack.c.b16 %v320, %v319
        %v330 = vpack.c.b16 %v322, %v321
        %339 = vmatprep.subr.bf16.mxu0 0
        %340 = vmatpush1.bf16.msra.mxu0 %v323
        %341 = vmatprep.subr.bf16.mxu0 0
        %342 = vmatpush1.bf16.msra.mxu0 %v324
        %343 = vmatprep.subr.bf16.mxu0 0
        %344 = vmatpush1.bf16.msra.mxu0 %v325
        %345 = vmatprep.subr.bf16.mxu0 0
        %346 = vmatpush1.bf16.msra.mxu0 %v326
        %347 = vmatprep.subr.bf16.mxu0 0
        %348 = vmatpush1.bf16.msra.mxu0 %v327
        %349 = vmatprep.subr.bf16.mxu0 0
        %350 = vmatpush1.bf16.msra.mxu0 %v328
        %351 = vmatprep.subr.bf16.mxu0 0
        %352 = vmatpush1.bf16.msra.mxu0 %v329
        %353 = vmatprep.subr.bf16.mxu0 0
        %354 = vmatpush1.bf16.msra.mxu0 %v330
        %355 = vmatprep.subr.bf16.mxu0 0
        %356 = vmatpush1.bf16.msra.mxu0 0
        %357 = vmatprep.subr.bf16.mxu0 0
        %358 = vmatpush1.bf16.msra.mxu0 0
        %359 = vmatprep.subr.bf16.mxu0 0
        %360 = vmatpush1.bf16.msra.mxu0 0
        %361 = vmatprep.subr.bf16.mxu0 0
        %362 = vmatpush1.bf16.msra.mxu0 0
        %363 = vmatprep.subr.bf16.mxu0 0
        %364 = vmatpush1.bf16.msra.mxu0 0
        %365 = vmatprep.subr.bf16.mxu0 0
        %366 = vmatpush1.bf16.msra.mxu0 0
        %367 = vmatprep.subr.bf16.mxu0 0
        %368 = vmatpush1.bf16.msra.mxu0 0
        %369 = vmatprep.subr.bf16.mxu0 0
        %370 = vmatpush1.bf16.msra.mxu0 0
        %371 = vmatprep.mubr.bf16.mxu0 0
        %372 = vmatmul.mubr.bf16.gmra.mrb[0].mxu0 %v267
        %v373 = vpop.f32.mrb[0].mxu0
        %v374 = vadd.f32 %v289, %v373
        %v375 = vpop.f32.mrb[0].mxu0
        %v376 = vpop.f32.mrb[0].mxu0
        %v377 = vpop.f32.mrb[0].mxu0
        %378 = vdwg.mxu0
        %s379 = sshra.s32 %s265, 7
        %s380 = sand.u32 %s265, 127
        %s381 = scalar_lea.vmem %s229, %s379 [#allocation3]
        %v382 = vld [vmem:[%s381] sm:$0xff]
        %s383 = sld [smem:[#allocation2]]
        %v384 = vstv %s383
        %v385 = vmul.f32 %v384, %v374
        %v386 = vadd.f32 %v385, %v382
        %387 = vst [vmem:[%s260] sm:$0xff] %v386
        %s388 = sand.u32 %s144, 1
        %s389 = scalar_lea.sflag [#allocation5], %s388
        %s390 = sand.u32 %s144, 1
        %s391 = smul.addr %s390, 8
        %s392 = scalar_lea.vmem [#allocation8], %s391
        // Predicated region
        $region45: #{tpu_custom_call.1} parent=35 // pred_check
          %p393 = pneg %p154
        $region46: #{tpu_custom_call.1} parent=35 // pred_check_branch
          %395 = sbr.rel (%p393) target = $region48
        $region47: #{tpu_custom_call.1} parent=35 // pred_region
          %s397 = ssub.s32 128, 128
          %398 = vsyncadd %s389, %s397
          %s399 = sadd.s32 %s28, %s27
          %s400 = smul.addr %s399, 128
          %s401 = scalar_lea.hbm %s4, %s400
          %s403 = sshll.u32 %s392, 4
          %s404 = int_to_ptr.vmem [resolvable:$true] %s403
          %406 = dma.vmem_to_hbm [thread:$0]  %s404, 128, %s401, %s389
        $region48: #{tpu_custom_call.1} parent=35 // pred_fallthru
          _
      $region36: #{tpu_custom_call.1} parent=5 // pred_fallthru
        _
      %p407 = scmp.le.s32.totalorder 2, %s18
      // Predicated region
      $region49: #{tpu_custom_call.1} parent=5 // pred_check
        %p408 = pneg %p407
      $region50: #{tpu_custom_call.1} parent=5 // pred_check_branch
        %410 = sbr.rel (%p408) target = $region52
      $region51: #{tpu_custom_call.1} parent=5 // pred_region
        %s411 = ssub.s32 %s18, 2
        // Predicated region
        $region53: #{tpu_custom_call.1} parent=51 // pred_check
          %p412 = pneg %p160
        $region54: #{tpu_custom_call.1} parent=51 // pred_check_branch
          %414 = sbr.rel (%p412) target = $region56
        $region55: #{tpu_custom_call.1} parent=51 // pred_region
          %s415 = sand.u32 %s145, 1
          %s416 = scalar_lea.sflag [#allocation5], %s415
          %s417 = sand.u32 %s145, 1
          %s418 = smul.addr %s417, 8
          %s419 = scalar_lea.vmem [#allocation8], %s418
          %420 = dma.done %s416, 128
        $region56: #{tpu_custom_call.1} parent=51 // pred_fallthru
          _
      $region52: #{tpu_custom_call.1} parent=5 // pred_fallthru
        _
    $region6: #{tpu_custom_call.1} parent=1 // loop_footer
      %s22 = sadd.s32 1, %s18
    $region7: #{tpu_custom_call.1} parent=1 // loop_footer_branch
      %17 = sbr.rel target = $region3
    $region8: #{tpu_custom_call.1} parent=1 // loop_exit
      _
    %421 = vsyncpa [#allocation4], 1
    %s422 = scalar_lea.sflag [#allocation4], 1
    %423 = vsyncpa %s422, 1
    %424 = vsyncpa [#allocation7], 1
    %425 = vsyncpa [#allocation5], 1
    %s426 = scalar_lea.sflag [#allocation5], 1
    %427 = vsyncpa %s426, 1

</llo_original>
